<compile_context>
chip_gen: v7x
topology: tpu7x:2x2x1
jax: 0.10.0
libtpu: 0.0.40
codegen_flags: <defaults>
</compile_context>

<pallas_src>
import functools

import numpy as np
import jax
import jax.numpy as jnp
from jax.experimental import pallas as pl
from jax.experimental.pallas import tpu as pltpu


_STRIP = 8     # rows per sublane strip (one vreg worth of row keys)
_UNROLL = 4    # strips accumulated per fori_loop iteration (amortize scalar overhead)


# ----------------------------------------------------------------------------
# Pallas kernel: one column tile per grid step
# ----------------------------------------------------------------------------
def _diagram_loss_kernel(cols_ref, rowkey_ref, out_ref, *,
                         g_fn, i_start, j_cap, remove_zero, n_bars,
                         tile_c, n_pad):
    """cols_ref   : (2, tile_c)  lane-dense [birth; death] of the bars whose
                    rank (and loss contribution) this step computes.
       rowkey_ref : (n_pad, 1)   fully-resident sort keys (death-birth) with
                    padding / removed bars folded to -inf.
       out_ref    : (1, 1, 128)  per-column-tile partial loss (lane-replicated).
    """
    c = pl.program_id(0)
    col_base = c * tile_c

    # ---- column side (lane-dense, computed once per tile) -------------------
    birth_c = cols_ref[0:1, :]                                   # (1, TC)
    death_c = cols_ref[1:2, :]
    key_c = death_c - birth_c                                    # sort key
    col_idx = jax.lax.broadcasted_iota(jnp.int32, (1, tile_c), 1) + col_base
    valid_c = col_idx < n_bars
    if remove_zero:
        valid_c = valid_c & (key_c != jnp.float32(0.0))

    # ---- pairwise descending rank, register-resident strip accumulation -----
    # rank[k] = #{ m : key[m] > key[k]  or (key[m] == key[k] and m < k) }
    # Row validity is already folded into rowkey as -inf, so each strip is a
    # single broadcast compare + accumulate on the VPU.
    chunk = _STRIP * _UNROLL                                     # rows / iteration
    sub_iota = jax.lax.broadcasted_iota(jnp.int32, (_STRIP, 1), 0)

    def _strip(row0):
        row0 = pl.multiple_of(row0, _STRIP)
        return rowkey_ref[pl.ds(row0, _STRIP), :]                # (8, 1)

    def body_before(q, acc):                                     # rows < col range
        for u in range(_UNROLL):
            k = _strip(q * chunk + u * _STRIP)
            acc = acc + (k >= key_c).astype(jnp.float32)         # tie -> row wins
        return acc

    def body_overlap(t, acc):                                    # rows in col range
        for u in range(_UNROLL):
            row0 = col_base + t * chunk + u * _STRIP
            k = _strip(row0)
            ridx = sub_iota + row0
            pred = (k > key_c) | ((k == key_c) & (ridx < col_idx))
            acc = acc + pred.astype(jnp.float32)
        return acc

    def body_after(q, acc):                                      # rows > col range
        for u in range(_UNROLL):
            k = _strip(q * chunk + u * _STRIP)
            acc = acc + (k > key_c).astype(jnp.float32)          # tie -> col wins
        return acc

    q_lo = c * (tile_c // chunk)           # chunks strictly before this tile
    q_hi = (c + 1) * (tile_c // chunk)     # first chunk strictly after it

    acc = jnp.zeros((_STRIP, tile_c), jnp.float32)
    acc = jax.lax.fori_loop(0, q_lo, body_before, acc)
    acc = jax.lax.fori_loop(0, tile_c // chunk, body_overlap, acc)
    acc = jax.lax.fori_loop(q_hi, n_pad // chunk, body_after, acc)
    rank = jnp.sum(acc, axis=0, keepdims=True)                   # (1, TC)

    # ---- select rank in [i, j) and apply g -----------------------------------
    selected = (valid_c
                & (rank >= jnp.float32(i_start))
                & (rank < jnp.float32(j_cap)))
    # Benign (birth=0, death=1) stand-ins so user g never sees padding.
    b_safe = jnp.where(selected, birth_c, jnp.float32(0.0))
    d_safe = jnp.where(selected, death_c, jnp.float32(1.0))
    g_vals = g_fn(b_safe, d_safe)
    contrib = jnp.where(selected, g_vals, jnp.float32(0.0)).astype(jnp.float32)
    partial = jnp.sum(contrib, axis=1, keepdims=True)            # (1, 1)
    out_ref[...] = jnp.broadcast_to(partial.reshape(1, 1, 1), (1, 1, 128))


# ----------------------------------------------------------------------------
# Wrapper (mirrors the PyTorch module's constructor / forward)
# ----------------------------------------------------------------------------
def _pick_tile_c(n_pad):
    """Largest lane-aligned column tile, preferring >= 2 tiles so the parallel
    grid axis can use both TensorCores on multi-TC parts (v7x)."""
    if n_pad <= 128:
        return 128
    for t in (1024, 768, 512, 384, 256, 128):
        if n_pad % t == 0 and n_pad // t >= 2:
            return t
    return 128


class DiagramLossPallas:
    """Pallas/TPU port of DiagramLoss.

    g must be a jnp-traceable element-wise function g(birth, death) -> values
    (applied per diagram point; same role as the per-point g in the reference).
    Each distinct number of bars triggers one recompilation (static shapes).
    """

    def __init__(self, dim, g, i=1, j=np.inf, remove_zero=True):
        self.dim = dim
        self.g = g
        self.i = i - 1                 # same convention as the torch module
        self.j = j
        self.remove_zero = remove_zero

    def __call__(self, dgminfo):
        dgms, _issublevel = dgminfo
        dgm = jnp.asarray(dgms[self.dim], dtype=jnp.float32)     # (n_bars, 2)
        n = int(dgm.shape[0])
        n_pad = max(128, ((n + 127) // 128) * 128)

        tile_c = _pick_tile_c(n_pad)
        grid_c = n_pad // tile_c

        # Host-side prep (tiny; fuses to a couple of trivial XLA ops).
        # TODO(synk): for a repeatedly-called loss, hoist this prep (pad,
        # transpose, -inf key fold) out of the per-call path.
        bars = jnp.pad(dgm, ((0, n_pad - n), (0, 0)))            # (n_pad, 2)
        cols = bars.T                                            # (2, n_pad) lane-dense
        length = bars[:, 1] - bars[:, 0]
        valid_row = jnp.arange(n_pad) < n
        if self.remove_zero:
            valid_row = valid_row & (length != 0.0)
        row_key = jnp.where(valid_row, length, -jnp.inf)[:, None]  # (n_pad, 1)

        j_cap = float(self.j) if np.isfinite(self.j) else float(n_pad + 1)

        kernel = functools.partial(
            _diagram_loss_kernel,
            g_fn=self.g,
            i_start=float(self.i),
            j_cap=j_cap,
            remove_zero=self.remove_zero,
            n_bars=n,
            tile_c=tile_c,
            n_pad=n_pad,
        )

        grid_spec = pltpu.PrefetchScalarGridSpec(
            num_scalar_prefetch=0,
            grid=(grid_c,),
            in_specs=[
                pl.BlockSpec((2, tile_c), lambda c: (0, c)),     # column view
                pl.BlockSpec((n_pad, 1), lambda c: (0, 0)),      # resident row keys
            ],
            out_specs=pl.BlockSpec((1, 1, 128), lambda c: (c, 0, 0)),
        )

        # VMEM budget: double-buffered inputs; the (n_pad, 1) key is
        # lane-padded to (n_pad, 128) in VMEM.  Cap at v7x's 64 MiB physical.
        need = 2 * (8 * tile_c * 4 + n_pad * 128 * 4) + grid_c * 8 * 128 * 4
        vmem_limit = int(min(64 << 20, max(32 << 20, 2 * need)))

        flops = 3 * n_pad * n_pad
        bytes_accessed = 4 * (2 * n_pad + n_pad + grid_c * 128)

        out = pl.pallas_call(
            kernel,
            out_shape=jax.ShapeDtypeStruct((grid_c, 1, 128), jnp.float32),
            grid_spec=grid_spec,
            compiler_params=pltpu.CompilerParams(
                dimension_semantics=("parallel",),
                vmem_limit_bytes=vmem_limit,
            ),
            cost_estimate=pl.CostEstimate(
                flops=flops, transcendentals=0, bytes_accessed=bytes_accessed),
        )(cols, row_key)

        # One partial per column tile, lane-replicated; tiny fused reduce.
        return jnp.sum(out[:, 0, 0])


# ----------------------------------------------------------------------------
# Pure-numpy reference (replicates the torch forward exactly)
# ----------------------------------------------------------------------------
def _reference_loss(dgm, g_np, i=1, j=np.inf, remove_zero=True):
    dgm = np.asarray(dgm, dtype=np.float32)
    if remove_zero:
        dgm = dgm[dgm[:, 0] != dgm[:, 1]]
    lengths = dgm[:, 1] - dgm[:, 0]
    order = np.argsort(-lengths, kind="stable")
    end = dgm.shape[0] if not np.isfinite(j) else int(min(dgm.shape[0], j))
    sel = order[i - 1:end]
    if sel.size == 0:
        return 0.0
    pts = dgm[sel].astype(np.float64)
    return float(np.sum(g_np(pts[:, 0], pts[:, 1])))


# ----------------------------------------------------------------------------
# Demo
# ----------------------------------------------------------------------------
if __name__ == "__main__":
    key = jax.random.PRNGKey(0)
    k1, k2, k3, k4, k5, k6 = jax.random.split(key, 6)

    g = lambda b, d: (d - b) ** 2          # squared persistence of a point
    g_np = lambda b, d: (d - b) ** 2

    def make_dgm(kb, kp, n, zero_every=None):
        birth = jax.random.uniform(kb, (n,), dtype=jnp.float32)
        pers = jax.random.uniform(kp, (n,), dtype=jnp.float32)
        if zero_every:
            pers = jnp.where(jnp.arange(n) % zero_every == 0, 0.0, pers)
        return jnp.stack([birth, birth + pers], axis=1)

    # Synthetic persistence diagrams for homology dims 0, 1, 2.
    dgm0 = make_dgm(k1, k2, 37, zero_every=7)     # (37, 2)   -> n_pad=128,  grid_c=1
    dgm1 = make_dgm(k3, k4, 11)                   # (11, 2)   -> n_pad=128,  grid_c=1
    dgm2 = make_dgm(k5, k6, 1500, zero_every=13)  # (1500, 2) -> n_pad=1536, grid_c=2
    dgms = [dgm0, dgm1, dgm2]
    dgminfo = (dgms, True)

    tests = [
        dict(dim=0, i=2, j=12, remove_zero=True),
        dict(dim=0, i=1, j=5, remove_zero=False),
        dict(dim=1, i=1, j=np.inf, remove_zero=True),
        dict(dim=2, i=1, j=np.inf, remove_zero=True),
    ]
    for t in tests:
        loss_fn = DiagramLossPallas(dim=t["dim"], g=g, i=t["i"], j=t["j"],
                                    remove_zero=t["remove_zero"])
        loss = loss_fn(dgminfo)
        jax.block_until_ready(loss)
        ref = _reference_loss(np.asarray(dgms[t["dim"]]), g_np,
                              i=t["i"], j=t["j"], remove_zero=t["remove_zero"])
        err = abs(float(loss) - ref) / max(1.0, abs(ref))
        assert err < 1e-3, (t, float(loss), ref)

    print("KERNEL_OK")
</pallas_src>

<mosaic_0001>
module attributes {stable_mosaic.version = 11 : i64} {
  func.func @_diagram_loss_kernel(%arg0: i32, %arg1: memref<2x128xf32, #tpu.memory_space<vmem>>, %arg2: memref<128x1xf32, #tpu.memory_space<vmem>>, %arg3: memref<1x1x128xf32, #tpu.memory_space<vmem>>) attributes {dimension_semantics = [#tpu.dimension_semantics<parallel>], iteration_bounds = array<i64: 1>, scalar_prefetch = 0 : i64, scratch_operands = 0 : i64, tpu.core_type = #tpu.core_type<tc>, window_params = [{transform_indices = @transform_0, window_bounds = array<i64: 2, 128>}, {pipeline_mode = #tpu.pipeline_mode<synchronous>, transform_indices = @transform_1, window_bounds = array<i64: 128, 1>}, {transform_indices = @transform_2, window_bounds = array<i64: 1, 1, 128>}]} {
    %c128_i32 = arith.constant 128 : i32
    %0 = arith.muli %arg0, %c128_i32 : i32
    %c0 = arith.constant 0 : index
    %c0_0 = arith.constant 0 : index
    %1 = vector.load %arg1[%c0, %c0_0] : memref<2x128xf32, #tpu.memory_space<vmem>>, vector<1x128xf32>
    %c1 = arith.constant 1 : index
    %c0_1 = arith.constant 0 : index
    %2 = vector.load %arg1[%c1, %c0_1] : memref<2x128xf32, #tpu.memory_space<vmem>>, vector<1x128xf32>
    %3 = arith.subf %2, %1 : vector<1x128xf32>
    %4 = tpu.iota {dimensions = array<i32: 1>} : vector<1x128xi32>
    %5 = vector.broadcast %0 : i32 to vector<1x128xi32>
    %6 = arith.addi %4, %5 : vector<1x128xi32>
    %c37_i32 = arith.constant 37 : i32
    %7 = vector.broadcast %c37_i32 : i32 to vector<1x128xi32>
    %8 = arith.cmpi slt, %6, %7 : vector<1x128xi32>
    %cst = arith.constant 0.000000e+00 : f32
    %9 = vector.broadcast %cst : f32 to vector<1x128xf32>
    %10 = arith.cmpf one, %3, %9 : vector<1x128xf32>
    %11 = arith.andi %8, %10 : vector<1x128xi1>
    %12 = tpu.iota {dimensions = array<i32: 0>} : vector<8x1xi32>
    %c4_i32 = arith.constant 4 : i32
    %13 = arith.muli %arg0, %c4_i32 : i32
    %c1_i32 = arith.constant 1 : i32
    %14 = arith.addi %arg0, %c1_i32 : i32
    %c4_i32_2 = arith.constant 4 : i32
    %15 = arith.muli %14, %c4_i32_2 : i32
    %cst_3 = arith.constant 0.000000e+00 : f32
    %16 = vector.broadcast %cst_3 : f32 to vector<8x128xf32>
    %c0_i32 = arith.constant 0 : i32
    %17 = arith.subi %13, %c0_i32 : i32
    %18 = arith.addi %c0_i32, %17 : i32
    %c1_i32_4 = arith.constant 1 : i32
    %19 = scf.for %arg4 = %c0_i32 to %18 step %c1_i32_4 iter_args(%arg5 = %16) -> (vector<8x128xf32>)  : i32 {
      %c32_i32 = arith.constant 32 : i32
      %47 = arith.muli %arg4, %c32_i32 : i32
      %c0_i32_21 = arith.constant 0 : i32
      %48 = arith.addi %47, %c0_i32_21 : i32
      %49 = tpu.assume_multiple %48, 8 : i32
      %50 = arith.index_cast %49 : i32 to index
      %c0_22 = arith.constant 0 : index
      %51 = vector.load %arg2[%50, %c0_22] : memref<128x1xf32, #tpu.memory_space<vmem>>, vector<8x1xf32>
      %52 = vector.broadcast %51 : vector<8x1xf32> to vector<8x128xf32>
      %53 = vector.broadcast %3 : vector<1x128xf32> to vector<8x128xf32>
      %54 = arith.cmpf oge, %52, %53 : vector<8x128xf32>
      %55 = arith.extui %54 : vector<8x128xi1> to vector<8x128xi32>
      %56 = arith.sitofp %55 : vector<8x128xi32> to vector<8x128xf32>
      %57 = arith.addf %arg5, %56 : vector<8x128xf32>
      %c32_i32_23 = arith.constant 32 : i32
      %58 = arith.muli %arg4, %c32_i32_23 : i32
      %c8_i32 = arith.constant 8 : i32
      %59 = arith.addi %58, %c8_i32 : i32
      %60 = tpu.assume_multiple %59, 8 : i32
      %61 = arith.index_cast %60 : i32 to index
      %c0_24 = arith.constant 0 : index
      %62 = vector.load %arg2[%61, %c0_24] : memref<128x1xf32, #tpu.memory_space<vmem>>, vector<8x1xf32>
      %63 = vector.broadcast %62 : vector<8x1xf32> to vector<8x128xf32>
      %64 = vector.broadcast %3 : vector<1x128xf32> to vector<8x128xf32>
      %65 = arith.cmpf oge, %63, %64 : vector<8x128xf32>
      %66 = arith.extui %65 : vector<8x128xi1> to vector<8x128xi32>
      %67 = arith.sitofp %66 : vector<8x128xi32> to vector<8x128xf32>
      %68 = arith.addf %57, %67 : vector<8x128xf32>
      %c32_i32_25 = arith.constant 32 : i32
      %69 = arith.muli %arg4, %c32_i32_25 : i32
      %c16_i32 = arith.constant 16 : i32
      %70 = arith.addi %69, %c16_i32 : i32
      %71 = tpu.assume_multiple %70, 8 : i32
      %72 = arith.index_cast %71 : i32 to index
      %c0_26 = arith.constant 0 : index
      %73 = vector.load %arg2[%72, %c0_26] : memref<128x1xf32, #tpu.memory_space<vmem>>, vector<8x1xf32>
      %74 = vector.broadcast %73 : vector<8x1xf32> to vector<8x128xf32>
      %75 = vector.broadcast %3 : vector<1x128xf32> to vector<8x128xf32>
      %76 = arith.cmpf oge, %74, %75 : vector<8x128xf32>
      %77 = arith.extui %76 : vector<8x128xi1> to vector<8x128xi32>
      %78 = arith.sitofp %77 : vector<8x128xi32> to vector<8x128xf32>
      %79 = arith.addf %68, %78 : vector<8x128xf32>
      %c32_i32_27 = arith.constant 32 : i32
      %80 = arith.muli %arg4, %c32_i32_27 : i32
      %c24_i32 = arith.constant 24 : i32
      %81 = arith.addi %80, %c24_i32 : i32
      %82 = tpu.assume_multiple %81, 8 : i32
      %83 = arith.index_cast %82 : i32 to index
      %c0_28 = arith.constant 0 : index
      %84 = vector.load %arg2[%83, %c0_28] : memref<128x1xf32, #tpu.memory_space<vmem>>, vector<8x1xf32>
      %85 = vector.broadcast %84 : vector<8x1xf32> to vector<8x128xf32>
      %86 = vector.broadcast %3 : vector<1x128xf32> to vector<8x128xf32>
      %87 = arith.cmpf oge, %85, %86 : vector<8x128xf32>
      %88 = arith.extui %87 : vector<8x128xi1> to vector<8x128xi32>
      %89 = arith.sitofp %88 : vector<8x128xi32> to vector<8x128xf32>
      %90 = arith.addf %79, %89 : vector<8x128xf32>
      scf.yield %90 : vector<8x128xf32>
    }
    %c0_i32_5 = arith.constant 0 : i32
    %c4_i32_6 = arith.constant 4 : i32
    %20 = arith.addi %c0_i32_5, %c4_i32_6 : i32
    %c1_i32_7 = arith.constant 1 : i32
    %21 = scf.for %arg4 = %c0_i32_5 to %20 step %c1_i32_7 iter_args(%arg5 = %19) -> (vector<8x128xf32>)  : i32 {
      %c32_i32 = arith.constant 32 : i32
      %47 = arith.muli %arg4, %c32_i32 : i32
      %48 = arith.addi %0, %47 : i32
      %c0_i32_21 = arith.constant 0 : i32
      %49 = arith.addi %48, %c0_i32_21 : i32
      %50 = tpu.assume_multiple %49, 8 : i32
      %51 = arith.index_cast %50 : i32 to index
      %c0_22 = arith.constant 0 : index
      %52 = vector.load %arg2[%51, %c0_22] : memref<128x1xf32, #tpu.memory_space<vmem>>, vector<8x1xf32>
      %53 = vector.broadcast %49 : i32 to vector<8x1xi32>
      %54 = arith.addi %12, %53 : vector<8x1xi32>
      %55 = vector.broadcast %52 : vector<8x1xf32> to vector<8x128xf32>
      %56 = vector.broadcast %3 : vector<1x128xf32> to vector<8x128xf32>
      %57 = arith.cmpf ogt, %55, %56 : vector<8x128xf32>
      %58 = vector.broadcast %52 : vector<8x1xf32> to vector<8x128xf32>
      %59 = vector.broadcast %3 : vector<1x128xf32> to vector<8x128xf32>
      %60 = arith.cmpf oeq, %58, %59 : vector<8x128xf32>
      %61 = vector.broadcast %54 : vector<8x1xi32> to vector<8x128xi32>
      %62 = vector.broadcast %6 : vector<1x128xi32> to vector<8x128xi32>
      %63 = arith.cmpi slt, %61, %62 : vector<8x128xi32>
      %64 = arith.andi %60, %63 : vector<8x128xi1>
      %65 = arith.ori %57, %64 : vector<8x128xi1>
      %66 = arith.extui %65 : vector<8x128xi1> to vector<8x128xi32>
      %67 = arith.sitofp %66 : vector<8x128xi32> to vector<8x128xf32>
      %68 = arith.addf %arg5, %67 : vector<8x128xf32>
      %c32_i32_23 = arith.constant 32 : i32
      %69 = arith.muli %arg4, %c32_i32_23 : i32
      %70 = arith.addi %0, %69 : i32
      %c8_i32 = arith.constant 8 : i32
      %71 = arith.addi %70, %c8_i32 : i32
      %72 = tpu.assume_multiple %71, 8 : i32
      %73 = arith.index_cast %72 : i32 to index
      %c0_24 = arith.constant 0 : index
      %74 = vector.load %arg2[%73, %c0_24] : memref<128x1xf32, #tpu.memory_space<vmem>>, vector<8x1xf32>
      %75 = vector.broadcast %71 : i32 to vector<8x1xi32>
      %76 = arith.addi %12, %75 : vector<8x1xi32>
      %77 = vector.broadcast %74 : vector<8x1xf32> to vector<8x128xf32>
      %78 = vector.broadcast %3 : vector<1x128xf32> to vector<8x128xf32>
      %79 = arith.cmpf ogt, %77, %78 : vector<8x128xf32>
      %80 = vector.broadcast %74 : vector<8x1xf32> to vector<8x128xf32>
      %81 = vector.broadcast %3 : vector<1x128xf32> to vector<8x128xf32>
      %82 = arith.cmpf oeq, %80, %81 : vector<8x128xf32>
      %83 = vector.broadcast %76 : vector<8x1xi32> to vector<8x128xi32>
      %84 = vector.broadcast %6 : vector<1x128xi32> to vector<8x128xi32>
      %85 = arith.cmpi slt, %83, %84 : vector<8x128xi32>
      %86 = arith.andi %82, %85 : vector<8x128xi1>
      %87 = arith.ori %79, %86 : vector<8x128xi1>
      %88 = arith.extui %87 : vector<8x128xi1> to vector<8x128xi32>
      %89 = arith.sitofp %88 : vector<8x128xi32> to vector<8x128xf32>
      %90 = arith.addf %68, %89 : vector<8x128xf32>
      %c32_i32_25 = arith.constant 32 : i32
      %91 = arith.muli %arg4, %c32_i32_25 : i32
      %92 = arith.addi %0, %91 : i32
      %c16_i32 = arith.constant 16 : i32
      %93 = arith.addi %92, %c16_i32 : i32
      %94 = tpu.assume_multiple %93, 8 : i32
      %95 = arith.index_cast %94 : i32 to index
      %c0_26 = arith.constant 0 : index
      %96 = vector.load %arg2[%95, %c0_26] : memref<128x1xf32, #tpu.memory_space<vmem>>, vector<8x1xf32>
      %97 = vector.broadcast %93 : i32 to vector<8x1xi32>
      %98 = arith.addi %12, %97 : vector<8x1xi32>
      %99 = vector.broadcast %96 : vector<8x1xf32> to vector<8x128xf32>
      %100 = vector.broadcast %3 : vector<1x128xf32> to vector<8x128xf32>
      %101 = arith.cmpf ogt, %99, %100 : vector<8x128xf32>
      %102 = vector.broadcast %96 : vector<8x1xf32> to vector<8x128xf32>
      %103 = vector.broadcast %3 : vector<1x128xf32> to vector<8x128xf32>
      %104 = arith.cmpf oeq, %102, %103 : vector<8x128xf32>
      %105 = vector.broadcast %98 : vector<8x1xi32> to vector<8x128xi32>
      %106 = vector.broadcast %6 : vector<1x128xi32> to vector<8x128xi32>
      %107 = arith.cmpi slt, %105, %106 : vector<8x128xi32>
      %108 = arith.andi %104, %107 : vector<8x128xi1>
      %109 = arith.ori %101, %108 : vector<8x128xi1>
      %110 = arith.extui %109 : vector<8x128xi1> to vector<8x128xi32>
      %111 = arith.sitofp %110 : vector<8x128xi32> to vector<8x128xf32>
      %112 = arith.addf %90, %111 : vector<8x128xf32>
      %c32_i32_27 = arith.constant 32 : i32
      %113 = arith.muli %arg4, %c32_i32_27 : i32
      %114 = arith.addi %0, %113 : i32
      %c24_i32 = arith.constant 24 : i32
      %115 = arith.addi %114, %c24_i32 : i32
      %116 = tpu.assume_multiple %115, 8 : i32
      %117 = arith.index_cast %116 : i32 to index
      %c0_28 = arith.constant 0 : index
      %118 = vector.load %arg2[%117, %c0_28] : memref<128x1xf32, #tpu.memory_space<vmem>>, vector<8x1xf32>
      %119 = vector.broadcast %115 : i32 to vector<8x1xi32>
      %120 = arith.addi %12, %119 : vector<8x1xi32>
      %121 = vector.broadcast %118 : vector<8x1xf32> to vector<8x128xf32>
      %122 = vector.broadcast %3 : vector<1x128xf32> to vector<8x128xf32>
      %123 = arith.cmpf ogt, %121, %122 : vector<8x128xf32>
      %124 = vector.broadcast %118 : vector<8x1xf32> to vector<8x128xf32>
      %125 = vector.broadcast %3 : vector<1x128xf32> to vector<8x128xf32>
      %126 = arith.cmpf oeq, %124, %125 : vector<8x128xf32>
      %127 = vector.broadcast %120 : vector<8x1xi32> to vector<8x128xi32>
      %128 = vector.broadcast %6 : vector<1x128xi32> to vector<8x128xi32>
      %129 = arith.cmpi slt, %127, %128 : vector<8x128xi32>
      %130 = arith.andi %126, %129 : vector<8x128xi1>
      %131 = arith.ori %123, %130 : vector<8x128xi1>
      %132 = arith.extui %131 : vector<8x128xi1> to vector<8x128xi32>
      %133 = arith.sitofp %132 : vector<8x128xi32> to vector<8x128xf32>
      %134 = arith.addf %112, %133 : vector<8x128xf32>
      scf.yield %134 : vector<8x128xf32>
    }
    %c4_i32_8 = arith.constant 4 : i32
    %c4_i32_9 = arith.constant 4 : i32
    %22 = arith.subi %c4_i32_9, %15 : i32
    %23 = arith.addi %15, %22 : i32
    %c1_i32_10 = arith.constant 1 : i32
    %24 = scf.for %arg4 = %15 to %23 step %c1_i32_10 iter_args(%arg5 = %21) -> (vector<8x128xf32>)  : i32 {
      %c32_i32 = arith.constant 32 : i32
      %47 = arith.muli %arg4, %c32_i32 : i32
      %c0_i32_21 = arith.constant 0 : i32
      %48 = arith.addi %47, %c0_i32_21 : i32
      %49 = tpu.assume_multiple %48, 8 : i32
      %50 = arith.index_cast %49 : i32 to index
      %c0_22 = arith.constant 0 : index
      %51 = vector.load %arg2[%50, %c0_22] : memref<128x1xf32, #tpu.memory_space<vmem>>, vector<8x1xf32>
      %52 = vector.broadcast %51 : vector<8x1xf32> to vector<8x128xf32>
      %53 = vector.broadcast %3 : vector<1x128xf32> to vector<8x128xf32>
      %54 = arith.cmpf ogt, %52, %53 : vector<8x128xf32>
      %55 = arith.extui %54 : vector<8x128xi1> to vector<8x128xi32>
      %56 = arith.sitofp %55 : vector<8x128xi32> to vector<8x128xf32>
      %57 = arith.addf %arg5, %56 : vector<8x128xf32>
      %c32_i32_23 = arith.constant 32 : i32
      %58 = arith.muli %arg4, %c32_i32_23 : i32
      %c8_i32 = arith.constant 8 : i32
      %59 = arith.addi %58, %c8_i32 : i32
      %60 = tpu.assume_multiple %59, 8 : i32
      %61 = arith.index_cast %60 : i32 to index
      %c0_24 = arith.constant 0 : index
      %62 = vector.load %arg2[%61, %c0_24] : memref<128x1xf32, #tpu.memory_space<vmem>>, vector<8x1xf32>
      %63 = vector.broadcast %62 : vector<8x1xf32> to vector<8x128xf32>
      %64 = vector.broadcast %3 : vector<1x128xf32> to vector<8x128xf32>
      %65 = arith.cmpf ogt, %63, %64 : vector<8x128xf32>
      %66 = arith.extui %65 : vector<8x128xi1> to vector<8x128xi32>
      %67 = arith.sitofp %66 : vector<8x128xi32> to vector<8x128xf32>
      %68 = arith.addf %57, %67 : vector<8x128xf32>
      %c32_i32_25 = arith.constant 32 : i32
      %69 = arith.muli %arg4, %c32_i32_25 : i32
      %c16_i32 = arith.constant 16 : i32
      %70 = arith.addi %69, %c16_i32 : i32
      %71 = tpu.assume_multiple %70, 8 : i32
      %72 = arith.index_cast %71 : i32 to index
      %c0_26 = arith.constant 0 : index
      %73 = vector.load %arg2[%72, %c0_26] : memref<128x1xf32, #tpu.memory_space<vmem>>, vector<8x1xf32>
      %74 = vector.broadcast %73 : vector<8x1xf32> to vector<8x128xf32>
      %75 = vector.broadcast %3 : vector<1x128xf32> to vector<8x128xf32>
      %76 = arith.cmpf ogt, %74, %75 : vector<8x128xf32>
      %77 = arith.extui %76 : vector<8x128xi1> to vector<8x128xi32>
      %78 = arith.sitofp %77 : vector<8x128xi32> to vector<8x128xf32>
      %79 = arith.addf %68, %78 : vector<8x128xf32>
      %c32_i32_27 = arith.constant 32 : i32
      %80 = arith.muli %arg4, %c32_i32_27 : i32
      %c24_i32 = arith.constant 24 : i32
      %81 = arith.addi %80, %c24_i32 : i32
      %82 = tpu.assume_multiple %81, 8 : i32
      %83 = arith.index_cast %82 : i32 to index
      %c0_28 = arith.constant 0 : index
      %84 = vector.load %arg2[%83, %c0_28] : memref<128x1xf32, #tpu.memory_space<vmem>>, vector<8x1xf32>
      %85 = vector.broadcast %84 : vector<8x1xf32> to vector<8x128xf32>
      %86 = vector.broadcast %3 : vector<1x128xf32> to vector<8x128xf32>
      %87 = arith.cmpf ogt, %85, %86 : vector<8x128xf32>
      %88 = arith.extui %87 : vector<8x128xi1> to vector<8x128xi32>
      %89 = arith.sitofp %88 : vector<8x128xi32> to vector<8x128xf32>
      %90 = arith.addf %79, %89 : vector<8x128xf32>
      scf.yield %90 : vector<8x128xf32>
    }
    %cst_11 = arith.constant dense<0.000000e+00> : vector<128xf32>
    %25 = vector.multi_reduction <add>, %24, %cst_11 [0] : vector<8x128xf32> to vector<128xf32>
    %26 = vector.shape_cast %25 : vector<128xf32> to vector<1x128xf32>
    %cst_12 = arith.constant 1.000000e+00 : f32
    %27 = vector.broadcast %cst_12 : f32 to vector<1x128xf32>
    %28 = arith.cmpf oge, %26, %27 : vector<1x128xf32>
    %29 = arith.andi %11, %28 : vector<1x128xi1>
    %cst_13 = arith.constant 1.200000e+01 : f32
    %30 = vector.broadcast %cst_13 : f32 to vector<1x128xf32>
    %31 = arith.cmpf olt, %26, %30 : vector<1x128xf32>
    %32 = arith.andi %29, %31 : vector<1x128xi1>
    %cst_14 = arith.constant 0.000000e+00 : f32
    %33 = vector.broadcast %cst_14 : f32 to vector<1x128xf32>
    %34 = arith.select %32, %1, %33 : vector<1x128xi1>, vector<1x128xf32>
    %cst_15 = arith.constant 1.000000e+00 : f32
    %35 = vector.broadcast %cst_15 : f32 to vector<1x128xf32>
    %36 = arith.select %32, %2, %35 : vector<1x128xi1>, vector<1x128xf32>
    %37 = arith.subf %36, %34 : vector<1x128xf32>
    %38 = arith.mulf %37, %37 : vector<1x128xf32>
    %cst_16 = arith.constant 0.000000e+00 : f32
    %39 = vector.broadcast %cst_16 : f32 to vector<1x128xf32>
    %40 = arith.select %32, %38, %39 : vector<1x128xi1>, vector<1x128xf32>
    %cst_17 = arith.constant dense<0.000000e+00> : vector<1xf32>
    %41 = vector.multi_reduction <add>, %40, %cst_17 [1] : vector<1x128xf32> to vector<1xf32>
    %42 = vector.shape_cast %41 : vector<1xf32> to vector<1x1xf32>
    %43 = vector.shape_cast %42 : vector<1x1xf32> to vector<1x1x1xf32>
    %44 = vector.shape_cast %43 : vector<1x1x1xf32> to vector<1x1x1xf32>
    %45 = vector.broadcast %44 : vector<1x1x1xf32> to vector<1x1x128xf32>
    %c0_18 = arith.constant 0 : index
    %c0_19 = arith.constant 0 : index
    %c0_20 = arith.constant 0 : index
    %46 = vector.load %arg3[%c0_18, %c0_19, %c0_20] : memref<1x1x128xf32, #tpu.memory_space<vmem>>, vector<1x1x128xf32>
    tpu.vector_store %arg3[%c0_18, %c0_19, %c0_20], %45 {strides = array<i32>} : memref<1x1x128xf32, #tpu.memory_space<vmem>>, vector<1x1x128xf32>,
    return
  }
  func.func @transform_0(%arg0: i32) -> (i32, i32) {
    %c0_i32 = arith.constant 0 : i32
    %c0_i32_0 = arith.constant 0 : i32
    return %c0_i32, %arg0 : i32, i32
  }
  func.func @transform_1(%arg0: i32) -> (i32, i32) {
    %c0_i32 = arith.constant 0 : i32
    %c0_i32_0 = arith.constant 0 : i32
    %c0_i32_1 = arith.constant 0 : i32
    return %c0_i32, %c0_i32_0 : i32, i32
  }
  func.func @transform_2(%arg0: i32) -> (i32, i32, i32) {
    %c0_i32 = arith.constant 0 : i32
    %c0_i32_0 = arith.constant 0 : i32
    %c0_i32_1 = arith.constant 0 : i32
    return %arg0, %c0_i32, %c0_i32_0 : i32, i32, i32
  }
}

</mosaic_0001>

<llo_original>
// kernel: tpu_custom_call.1
$region0: #{tpu_custom_call.1}
  #allocation0 [shape = 'u32[]', space=smem, size = 0x4, offset = 0x4, fixed_abs, tag = 'smem constant byte address 0x4 - core index']
  #allocation1 [shape = 'u32[144,128]{1,0:T(1,128)}', space=vmem, size = 0x12000, scoped, tag = 'internal scratch']
  %s0 = inlined_call_operand.vmem [shape: f32[2,128], index: 0, kind: input, shape index: {}]
  %s1 = inlined_call_operand.vmem [shape: f32[128,1], index: 1, kind: input, shape index: {}]
  %s2 = inlined_call_operand.hbm [shape: f32[1,1,128], index: 2, kind: output, shape index: {}]
  %s3 = sld [smem:[#allocation0]]
  $region39: #{tpu_custom_call.1} parent=0
    _
  %s5 = ssub.s32 1, %s3
  %s6 = scalar_select 0, %s5, %s3
  $region1: #{tpu_custom_call.1} parent=0
    #allocation2 [shape = 'u8[512]{0}', space=vmem, size = 0x400, scoped, tag = 'output window, operand 0, single buffered']
    #allocation3 [shape = 's32[1]{0}', space=sflag, size = 0x4, scoped, tag = 'scoped memory for tpu_custom_call.1']
    %7 = vsyncpa [#allocation3], 0
    // Predicated region
    $region2: #{tpu_custom_call.1} parent=1 // pred_check
      _
    $region3: #{tpu_custom_call.1} parent=1 // pred_check_branch
      %9 = sbr.rel (0) target = $region5
    $region4: #{tpu_custom_call.1} parent=1 // pred_region
      _
    $region5: #{tpu_custom_call.1} parent=1 // pred_fallthru
      _
    // Predicated region
    $region6: #{tpu_custom_call.1} parent=1 // pred_check
      _
    $region7: #{tpu_custom_call.1} parent=1 // pred_check_branch
      %11 = sbr.rel (0) target = $region9
    $region8: #{tpu_custom_call.1} parent=1 // pred_region
      _
    $region9: #{tpu_custom_call.1} parent=1 // pred_fallthru
      _
    %s12 = smul.u32 0, 128
    %v13 = vld [vmem:[%s0] sm:$0x1]
    %v14 = vld [vmem:[%s0 + $0x1] sm:$0x1]
    %v15 = vsub.f32 %v14, %v13
    %v16 = vlaneseq
    %v17 = vand.u32 %v16, 127
    %v18 = vstv %s12
    %v19 = vadd.s32 %v17, %v18
    %vm20 = vcmp.lt.s32.totalorder %v19, 37
    %vm21 = vcmp.ne.f32.partialorder %v15, 0.0
    %vm22 = vmand %vm20, %vm21
    %v23 = vlaneseq
    %v24 = vshrl.u32 %v23, 7
    %s25 = smul.u32 0, 4
    %s26 = sadd.s32 0, 1
    %s27 = smul.u32 %s26, 4
    // While loop
    $region10: #{tpu_custom_call.1} parent=1 // loop_pre_header
      _
    $region11: #{tpu_custom_call.1} parent=1 // loop_header
      %s29 = sphi 0, %s31
      %p30 = scmp.ge.s32.totalorder %s29, %s25
      %v34 = vphi 0.0, %v86
    $region12: #{tpu_custom_call.1} parent=1 // loop_header_branch
      %33 = sbr.rel (%p30) target = $region16
    $region13: #{tpu_custom_call.1} parent=1 // loop_body
      %s35 = smul.u32 %s29, 32
      %s36 = scalar_lea.vmem %s1, %s35
      %v37 = vld [vmem:[%s36] sm:$0xff]
      %39 = vset.pattern.permute.xlu0 0
      %40 = vperm.xlu0 %39, %v37
      %v41 = vpop.permute.xlu0 %40
      %v43 = vlaneseq
      %v44 = vshrl.u32 %v43, 7
      %v45 = vsub.s32 0, %v44
      %v46 = vrot.slane %v15, %v45
      %vm47 = vcmp.ge.f32.partialorder %v41, %v46
      %v48 = vsel %vm47, 1, 0
      %v49 = vcvt.s32.f32 %v48
      %v50 = vadd.f32 %v34, %v49
      %s51 = sadd.s32 %s35, 8
      %s52 = scalar_lea.vmem %s1, %s51
      %v53 = vld [vmem:[%s52] sm:$0xff]
      %55 = vset.pattern.permute.xlu0 0
      %56 = vperm.xlu0 %55, %v53
      %v57 = vpop.permute.xlu0 %56
      %vm59 = vcmp.ge.f32.partialorder %v57, %v46
      %v60 = vsel %vm59, 1, 0
      %v61 = vcvt.s32.f32 %v60
      %v62 = vadd.f32 %v50, %v61
      %s63 = sadd.s32 %s35, 16
      %s64 = scalar_lea.vmem %s1, %s63
      %v65 = vld [vmem:[%s64] sm:$0xff]
      %67 = vset.pattern.permute.xlu0 0
      %68 = vperm.xlu0 %67, %v65
      %v69 = vpop.permute.xlu0 %68
      %vm71 = vcmp.ge.f32.partialorder %v69, %v46
      %v72 = vsel %vm71, 1, 0
      %v73 = vcvt.s32.f32 %v72
      %v74 = vadd.f32 %v62, %v73
      %s75 = sadd.s32 %s35, 24
      %s76 = scalar_lea.vmem %s1, %s75
      %v77 = vld [vmem:[%s76] sm:$0xff]
      %79 = vset.pattern.permute.xlu0 0
      %80 = vperm.xlu0 %79, %v77
      %v81 = vpop.permute.xlu0 %80
      %vm83 = vcmp.ge.f32.partialorder %v81, %v46
      %v84 = vsel %vm83, 1, 0
      %v85 = vcvt.s32.f32 %v84
      %v86 = vadd.f32 %v74, %v85
    $region14: #{tpu_custom_call.1} parent=1 // loop_footer
      %s31 = sadd.s32 %s29, 1
    $region15: #{tpu_custom_call.1} parent=1 // loop_footer_branch
      %28 = sbr.rel target = $region11
    $region16: #{tpu_custom_call.1} parent=1 // loop_exit
      _
    loop: start=0, step=1, limit=4
    $region17: #{tpu_custom_call.1} parent=1 // loop_pre_header
      _
    $region18: #{tpu_custom_call.1} parent=1 // loop_header
      %s88 = sphi 0, %s92
      %p89 = scmp.ge.s32.totalorder %s88, 4
      %v93 = vphi %v34, %v170
    $region19: #{tpu_custom_call.1} parent=1 // loop_header_branch
      %91 = sbr.rel (%p89) target = $region23
    $region20: #{tpu_custom_call.1} parent=1 // loop_body
      %s94 = smul.u32 %s88, 32
      %s95 = sadd.s32 %s12, %s94
      %s96 = scalar_lea.vmem %s1, %s95
      %v97 = vld [vmem:[%s96] sm:$0xff]
      %v98 = vstv %s95
      %v99 = vadd.s32 %v24, %v98
      %101 = vset.pattern.permute.xlu0 0
      %102 = vperm.xlu0 %101, %v97
      %v103 = vpop.permute.xlu0 %102
      %v105 = vlaneseq
      %v106 = vshrl.u32 %v105, 7
      %v107 = vsub.s32 0, %v106
      %v108 = vrot.slane %v15, %v107
      %vm109 = vcmp.gt.f32.partialorder %v103, %v108
      %vm110 = vcmp.eq.f32.partialorder %v103, %v108
      %vm111 = vcmp.lt.s32.totalorder %v99, %v19
      %vm112 = vmand %vm110, %vm111
      %vm113 = vmor %vm109, %vm112
      %v114 = vsel %vm113, 1, 0
      %v115 = vcvt.s32.f32 %v114
      %v116 = vadd.f32 %v93, %v115
      %s117 = sadd.s32 %s95, 8
      %s118 = scalar_lea.vmem %s1, %s117
      %v119 = vld [vmem:[%s118] sm:$0xff]
      %v120 = vstv %s117
      %v121 = vadd.s32 %v24, %v120
      %123 = vset.pattern.permute.xlu0 0
      %124 = vperm.xlu0 %123, %v119
      %v125 = vpop.permute.xlu0 %124
      %vm127 = vcmp.gt.f32.partialorder %v125, %v108
      %vm128 = vcmp.eq.f32.partialorder %v125, %v108
      %vm129 = vcmp.lt.s32.totalorder %v121, %v19
      %vm130 = vmand %vm128, %vm129
      %vm131 = vmor %vm127, %vm130
      %v132 = vsel %vm131, 1, 0
      %v133 = vcvt.s32.f32 %v132
      %v134 = vadd.f32 %v116, %v133
      %s135 = sadd.s32 %s95, 16
      %s136 = scalar_lea.vmem %s1, %s135
      %v137 = vld [vmem:[%s136] sm:$0xff]
      %v138 = vstv %s135
      %v139 = vadd.s32 %v24, %v138
      %141 = vset.pattern.permute.xlu0 0
      %142 = vperm.xlu0 %141, %v137
      %v143 = vpop.permute.xlu0 %142
      %vm145 = vcmp.gt.f32.partialorder %v143, %v108
      %vm146 = vcmp.eq.f32.partialorder %v143, %v108
      %vm147 = vcmp.lt.s32.totalorder %v139, %v19
      %vm148 = vmand %vm146, %vm147
      %vm149 = vmor %vm145, %vm148
      %v150 = vsel %vm149, 1, 0
      %v151 = vcvt.s32.f32 %v150
      %v152 = vadd.f32 %v134, %v151
      %s153 = sadd.s32 %s95, 24
      %s154 = scalar_lea.vmem %s1, %s153
      %v155 = vld [vmem:[%s154] sm:$0xff]
      %v156 = vstv %s153
      %v157 = vadd.s32 %v24, %v156
      %159 = vset.pattern.permute.xlu0 0
      %160 = vperm.xlu0 %159, %v155
      %v161 = vpop.permute.xlu0 %160
      %vm163 = vcmp.gt.f32.partialorder %v161, %v108
      %vm164 = vcmp.eq.f32.partialorder %v161, %v108
      %vm165 = vcmp.lt.s32.totalorder %v157, %v19
      %vm166 = vmand %vm164, %vm165
      %vm167 = vmor %vm163, %vm166
      %v168 = vsel %vm167, 1, 0
      %v169 = vcvt.s32.f32 %v168
      %v170 = vadd.f32 %v152, %v169
    $region21: #{tpu_custom_call.1} parent=1 // loop_footer
      %s92 = sadd.s32 1, %s88
    $region22: #{tpu_custom_call.1} parent=1 // loop_footer_branch
      %87 = sbr.rel target = $region18
    $region23: #{tpu_custom_call.1} parent=1 // loop_exit
      _
    // While loop
    $region24: #{tpu_custom_call.1} parent=1 // loop_pre_header
      _
    $region25: #{tpu_custom_call.1} parent=1 // loop_header
      %s172 = sphi %s27, %s174
      %p173 = scmp.ge.s32.totalorder %s172, 4
      %v177 = vphi %v93, %v229
    $region26: #{tpu_custom_call.1} parent=1 // loop_header_branch
      %176 = sbr.rel (%p173) target = $region30
    $region27: #{tpu_custom_call.1} parent=1 // loop_body
      %s178 = smul.u32 %s172, 32
      %s179 = scalar_lea.vmem %s1, %s178
      %v180 = vld [vmem:[%s179] sm:$0xff]
      %182 = vset.pattern.permute.xlu0 0
      %183 = vperm.xlu0 %182, %v180
      %v184 = vpop.permute.xlu0 %183
      %v186 = vlaneseq
      %v187 = vshrl.u32 %v186, 7
      %v188 = vsub.s32 0, %v187
      %v189 = vrot.slane %v15, %v188
      %vm190 = vcmp.gt.f32.partialorder %v184, %v189
      %v191 = vsel %vm190, 1, 0
      %v192 = vcvt.s32.f32 %v191
      %v193 = vadd.f32 %v177, %v192
      %s194 = sadd.s32 %s178, 8
      %s195 = scalar_lea.vmem %s1, %s194
      %v196 = vld [vmem:[%s195] sm:$0xff]
      %198 = vset.pattern.permute.xlu0 0
      %199 = vperm.xlu0 %198, %v196
      %v200 = vpop.permute.xlu0 %199
      %vm202 = vcmp.gt.f32.partialorder %v200, %v189
      %v203 = vsel %vm202, 1, 0
      %v204 = vcvt.s32.f32 %v203
      %v205 = vadd.f32 %v193, %v204
      %s206 = sadd.s32 %s178, 16
      %s207 = scalar_lea.vmem %s1, %s206
      %v208 = vld [vmem:[%s207] sm:$0xff]
      %210 = vset.pattern.permute.xlu0 0
      %211 = vperm.xlu0 %210, %v208
      %v212 = vpop.permute.xlu0 %211
      %vm214 = vcmp.gt.f32.partialorder %v212, %v189
      %v215 = vsel %vm214, 1, 0
      %v216 = vcvt.s32.f32 %v215
      %v217 = vadd.f32 %v205, %v216
      %s218 = sadd.s32 %s178, 24
      %s219 = scalar_lea.vmem %s1, %s218
      %v220 = vld [vmem:[%s219] sm:$0xff]
      %222 = vset.pattern.permute.xlu0 0
      %223 = vperm.xlu0 %222, %v220
      %v224 = vpop.permute.xlu0 %223
      %vm226 = vcmp.gt.f32.partialorder %v224, %v189
      %v227 = vsel %vm226, 1, 0
      %v228 = vcvt.s32.f32 %v227
      %v229 = vadd.f32 %v217, %v228
    $region28: #{tpu_custom_call.1} parent=1 // loop_footer
      %s174 = sadd.s32 %s172, 1
    $region29: #{tpu_custom_call.1} parent=1 // loop_footer_branch
      %171 = sbr.rel target = $region25
    $region30: #{tpu_custom_call.1} parent=1 // loop_exit
      _
    %v230 = vrot.slane %v177, 4
    %v231 = vadd.f32 %v177, %v230
    %v232 = vrot.slane %v231, 2
    %v233 = vadd.f32 %v231, %v232
    %v234 = vrot.slane %v233, 1
    %v235 = vadd.f32 %v233, %v234
    %vm236 = vcmp.ge.f32.partialorder %v235, 1.0
    %vm237 = vmand %vm22, %vm236
    %vm238 = vcmp.lt.f32.partialorder %v235, 12.0
    %vm239 = vmand %vm237, %vm238
    %v240 = vsel %vm239, %v13, 0.0
    %v241 = vsel %vm239, %v14, 1.0
    %v242 = vsub.f32 %v241, %v240
    %v243 = vmul.f32 %v242, %v242
    %v244 = vsel %vm239, %v243, 0.0
    %vm245 = vcmask 1040384
    %v246 = vsel %vm245, %v244, 0.0
    %247 = vadd.xlane.f32.xlu0 %v246
    %v248 = vpop.xlane.xlu0 %247
    %249 = vst [vmem:[#allocation2] sm:$0x1] %v248
    // Predicated region
    $region31: #{tpu_custom_call.1} parent=1 // pred_check
      _
    $region32: #{tpu_custom_call.1} parent=1 // pred_check_branch
      %251 = sbr.rel (0) target = $region34
    $region33: #{tpu_custom_call.1} parent=1 // pred_region
      %s253 = ssub.s32 16, 16
      %254 = vsyncadd [#allocation3], %s253
      %s256 = sshll.u32 [#allocation2], 4
      %s257 = int_to_ptr.vmem [resolvable:$true] %s256
      %259 = dma.vmem_to_hbm [thread:$0]  %s257, 16, %s2, [#allocation3]
    $region34: #{tpu_custom_call.1} parent=1 // pred_fallthru
      _
    // Predicated region
    $region35: #{tpu_custom_call.1} parent=1 // pred_check
      _
    $region36: #{tpu_custom_call.1} parent=1 // pred_check_branch
      %261 = sbr.rel (0) target = $region38
    $region37: #{tpu_custom_call.1} parent=1 // pred_region
      %262 = dma.done [#allocation3], 16
    $region38: #{tpu_custom_call.1} parent=1 // pred_fallthru
      _
    %263 = vsyncpa [#allocation3], 1

</llo_original>
